<compile_context>
chip_gen: v5e
topology: v5e:2x2
jax: 0.10.0
libtpu: 0.0.40
codegen_flags: <defaults>
</compile_context>

<pallas_src>
import functools

import jax
import jax.numpy as jnp
from jax import lax
from jax.experimental import pallas as pl
from jax.experimental.pallas import tpu as pltpu

_EPS = 1e-6  # matches F.pairwise_distance default eps


def _round_up(x, m):
    return ((x + m - 1) // m) * m


def _physical_vmem_bytes():
    try:
        return int(pltpu.get_tpu_info().vmem_capacity_bytes)
    except Exception:
        return 64 * 1024 * 1024  # v7x per-TC VMEM (smallest generation) as fallback


def _pick_tile_n(n_rows, d, itemsize):
    """Tile size from an HBM bytes-per-step target and a lane-padded VMEM budget."""
    phys = _physical_vmem_bytes()
    if phys <= 64 * 1024 * 1024:
        # v7x-class: 64 MiB VMEM per TensorCore, ~1.6 TB/s HBM per TC.
        buf_budget = 28 * 1024 * 1024
        step_target = 8 * 1024 * 1024     # HBM feature bytes per grid step (per core)
    else:
        # v5e / v6e: 128 MiB VMEM, single TensorCore.
        buf_budget = 48 * 1024 * 1024
        step_target = 16 * 1024 * 1024

    d_lanes = _round_up(d, 128)
    # VMEM per batch row: 2 feature inputs x 2 pipeline buffers, lane-padded to 128
    # lanes, plus the lane-dense label row (sublane-padded 8x), double-buffered.
    vmem_per_row = 4 * d_lanes * itemsize + 2 * 8 * 4
    # HBM bytes per batch row actually streamed per step.
    hbm_per_row = 2 * d * itemsize + 4

    tile_vmem = (buf_budget - 64 * 1024) // max(vmem_per_row, 1)
    tile_step = step_target // max(hbm_per_row, 1)
    tile = max(8, min(tile_vmem, tile_step))

    padded_n = _round_up(n_rows, 8)
    if tile >= padded_n:
        return padded_n          # single tile covers the whole batch
    if tile >= 128:
        return (tile // 128) * 128
    return (tile // 8) * 8


def _contrastive_loss_kernel(x1_ref, x2_ref, label_ref, out_ref, *,
                             margin, n_rows, tile_n, needs_mask):
    # Feature blocks: (tile_n, D); upcast so bf16 inputs stay bf16 in HBM.
    x1 = x1_ref[...].astype(jnp.float32)
    x2 = x2_ref[...].astype(jnp.float32)
    diff = x1 - x2 + _EPS                      # (tile_n, D)   VPU
    sq = diff * diff                           # (tile_n, D)   VPU

    # Per-row squared distance as a lane-dense (1, tile_n) row via the MXU:
    # ones(1, D) contracted against sq(tile_n, D) on the D axis (same contraction
    # pattern as q @ k.T). HIGHEST precision keeps full f32 accuracy.
    ones_row = jnp.ones((1, x1.shape[-1]), dtype=jnp.float32)
    sq_dist = lax.dot_general(
        ones_row, sq,
        dimension_numbers=(((1,), (1,)), ((), ())),
        preferred_element_type=jnp.float32,
        precision=lax.Precision.HIGHEST)       # (1, tile_n)

    if needs_mask:
        # Only the last tile has padded rows; the select on a (1, tile_n) row is
        # tile_n/128 vregs, so applying it unconditionally is cheap.
        row = pl.program_id(0) * tile_n + lax.broadcasted_iota(
            jnp.int32, (1, tile_n), 1)
        sq_dist = jnp.where(row < n_rows, sq_dist, 0.0)

    dist = jnp.sqrt(sq_dist)                   # (1, tile_n)   EUP
    hinge = jnp.maximum(margin - dist, 0.0)    # (1, tile_n)   VPU
    label = label_ref[...]                     # (1, tile_n)   lane-dense f32

    # (1-l)*d^2 + l*hinge^2 == d^2 + l*(hinge^2 - d^2); padded rows have l == 0 and
    # masked sq_dist == 0, so they contribute exactly 0.
    per_pair = sq_dist + label * (hinge * hinge - sq_dist)
    partial = jnp.sum(per_pair)

    # Lane-dense (8, 128) unmasked store: partial sum in [0, 0], zeros elsewhere, so
    # the wrapper can finish with a single contiguous jnp.sum (no strided gather).
    r = lax.broadcasted_iota(jnp.int32, (8, 128), 0)
    c = lax.broadcasted_iota(jnp.int32, (8, 128), 1)
    out_ref[...] = jnp.where((r == 0) & (c == 0), partial, 0.0)


def contrastive_loss(output1, output2, label, margin=2.0, tile_n=None):
    """output1, output2: (N, D); label: (N, 1) or (N,). Returns scalar f32 loss."""
    n, d = output1.shape
    assert output2.shape == (n, d)
    assert label.size == n

    itemsize = jnp.dtype(output1.dtype).itemsize
    if tile_n is None:
        tile_n = _pick_tile_n(n, d, itemsize)
    assert tile_n % 8 == 0 and tile_n > 0
    num_tiles = int(pl.cdiv(n, tile_n))
    padded_total = num_tiles * tile_n
    needs_mask = (n % tile_n) != 0

    # Lane-dense label: flat f32, zero-padded, one (1, tile_n) row per tile.
    lab = label.reshape(-1).astype(jnp.float32)
    if padded_total != n:
        lab = jnp.pad(lab, (0, padded_total - n))
    lab = lab.reshape(num_tiles, 1, tile_n)

    kernel = functools.partial(
        _contrastive_loss_kernel,
        margin=float(margin), n_rows=n, tile_n=tile_n, needs_mask=needs_mask)

    phys = _physical_vmem_bytes()
    vmem_limit = (48 * 1024 * 1024) if phys <= 64 * 1024 * 1024 else (96 * 1024 * 1024)

    bytes_accessed = (2 * n * d * itemsize        # two feature matrices
                      + padded_total * 4          # lane-dense label row(s)
                      + num_tiles * 8 * 128 * 4)  # partial-sum blocks
    cost = pl.CostEstimate(flops=5 * n * d + 10 * n,
                           transcendentals=n,
                           bytes_accessed=bytes_accessed)

    partials = pl.pallas_call(
        kernel,
        out_shape=jax.ShapeDtypeStruct((num_tiles * 8, 128), jnp.float32),
        grid_spec=pltpu.PrefetchScalarGridSpec(
            num_scalar_prefetch=0,
            grid=(num_tiles,),
            in_specs=[
                pl.BlockSpec((tile_n, d), lambda i: (i, 0)),
                pl.BlockSpec((tile_n, d), lambda i: (i, 0)),
                pl.BlockSpec((None, 1, tile_n), lambda i: (i, 0, 0)),
            ],
            out_specs=pl.BlockSpec((8, 128), lambda i: (i, 0)),
        ),
        compiler_params=pltpu.CompilerParams(
            dimension_semantics=("parallel",),   # each tile owns its output block
            vmem_limit_bytes=vmem_limit,
        ),
        cost_estimate=cost,
    )(output1, output2, lab)

    return jnp.sum(partials) / n


def _reference_loss(output1, output2, label, margin=2.0):
    # Pure-JAX reference mirroring the PyTorch module (computed in f32).
    x1 = output1.astype(jnp.float32)
    x2 = output2.astype(jnp.float32)
    lab = label.reshape(-1, 1).astype(jnp.float32)
    dist = jnp.sqrt(jnp.sum((x1 - x2 + _EPS) ** 2, axis=-1, keepdims=True))
    loss = (1.0 - lab) * dist ** 2 + lab * jnp.clip(margin - dist, 0.0) ** 2
    return jnp.mean(loss)


if __name__ == "__main__":
    key = jax.random.PRNGKey(0)
    k1, k2, k3 = jax.random.split(key, 3)

    # Small siamese-embedding batch; N deliberately not a multiple of the tile
    # so the padded-row masking path is exercised.
    N, D = 20, 32
    output1 = jax.random.normal(k1, (N, D), dtype=jnp.float32)
    output2 = jax.random.normal(k2, (N, D), dtype=jnp.float32)
    label = jax.random.bernoulli(k3, 0.5, (N, 1)).astype(jnp.float32)

    ref = _reference_loss(output1, output2, label, margin=2.0)

    # 1) Forced small tile -> multi-step grid (tests tiling + masking + partials).
    loss_tiled = jax.block_until_ready(
        contrastive_loss(output1, output2, label, margin=2.0, tile_n=8))
    assert jnp.allclose(loss_tiled, ref, rtol=1e-5, atol=1e-5), (loss_tiled, ref)

    # 2) Auto (generation-aware) tile size -> single padded tile here.
    loss_auto = jax.block_until_ready(
        contrastive_loss(output1, output2, label, margin=2.0))
    assert jnp.allclose(loss_auto, ref, rtol=1e-5, atol=1e-5), (loss_auto, ref)

    # 3) bf16 inputs kept in bf16 in HBM (kernel upcasts internally).
    o1b = output1.astype(jnp.bfloat16)
    o2b = output2.astype(jnp.bfloat16)
    ref_bf16 = _reference_loss(o1b, o2b, label, margin=2.0)
    loss_bf16 = jax.block_until_ready(
        contrastive_loss(o1b, o2b, label, margin=2.0, tile_n=8))
    assert jnp.allclose(loss_bf16, ref_bf16, rtol=1e-3, atol=1e-3), (loss_bf16, ref_bf16)

    # 4) Exact-multiple N (no-mask path), D > 128, multi-tile, non-default margin.
    N2, D2 = 256, 160
    o1 = jax.random.normal(k1, (N2, D2), dtype=jnp.float32)
    o2 = jax.random.normal(k2, (N2, D2), dtype=jnp.float32)
    lab2 = jax.random.bernoulli(k3, 0.5, (N2, 1)).astype(jnp.float32)
    ref2 = _reference_loss(o1, o2, lab2, margin=1.5)
    loss2 = jax.block_until_ready(
        contrastive_loss(o1, o2, lab2, margin=1.5, tile_n=64))
    assert jnp.allclose(loss2, ref2, rtol=1e-5, atol=1e-5), (loss2, ref2)

    print("KERNEL_OK")
</pallas_src>

<mosaic_0001>
module attributes {stable_mosaic.version = 11 : i64} {
  func.func @_contrastive_loss_kernel(%arg0: i32, %arg1: memref<8x32xf32, #tpu.memory_space<vmem>>, %arg2: memref<8x32xf32, #tpu.memory_space<vmem>>, %arg3: memref<1x1x8xf32, #tpu.memory_space<vmem>>, %arg4: memref<8x128xf32, #tpu.memory_space<vmem>>) attributes {dimension_semantics = [#tpu.dimension_semantics<parallel>], iteration_bounds = array<i64: 3>, scalar_prefetch = 0 : i64, scratch_operands = 0 : i64, tpu.core_type = #tpu.core_type<tc>, window_params = [{transform_indices = @transform_0, window_bounds = array<i64: 8, 32>}, {transform_indices = @transform_1, window_bounds = array<i64: 8, 32>}, {transform_indices = @transform_2, window_bounds = array<i64: 1, 1, 8>}, {transform_indices = @transform_3, window_bounds = array<i64: 8, 128>}]} {
    %c0 = arith.constant 0 : index
    %c0_0 = arith.constant 0 : index
    %0 = vector.load %arg1[%c0, %c0_0] : memref<8x32xf32, #tpu.memory_space<vmem>>, vector<8x32xf32>
    %c0_1 = arith.constant 0 : index
    %c0_2 = arith.constant 0 : index
    %1 = vector.load %arg2[%c0_1, %c0_2] : memref<8x32xf32, #tpu.memory_space<vmem>>, vector<8x32xf32>
    %2 = arith.subf %0, %1 : vector<8x32xf32>
    %cst = arith.constant 9.99999997E-7 : f32
    %3 = vector.broadcast %cst : f32 to vector<8x32xf32>
    %4 = arith.addf %2, %3 : vector<8x32xf32>
    %5 = arith.mulf %4, %4 : vector<8x32xf32>
    %cst_3 = arith.constant 1.000000e+00 : f32
    %6 = vector.broadcast %cst_3 : f32 to vector<1x32xf32>
    %cst_4 = arith.constant dense<0.000000e+00> : vector<1x8xf32>
    %7 = tpu.matmul %6, %5, %cst_4 {dimension_numbers = #tpu.dot_dimension_numbers<[1], [1], [0], [0], [0, 0, 1, 0], [], []>, precision = #tpu.contract_precision<fp32>} : vector<1x32xf32>, vector<8x32xf32>, vector<1x8xf32> -> vector<1x8xf32>
    %c8_i32 = arith.constant 8 : i32
    %8 = arith.muli %arg0, %c8_i32 : i32
    %9 = tpu.iota {dimensions = array<i32: 1>} : vector<1x8xi32>
    %10 = vector.broadcast %8 : i32 to vector<1x8xi32>
    %11 = arith.addi %10, %9 : vector<1x8xi32>
    %c20_i32 = arith.constant 20 : i32
    %12 = vector.broadcast %c20_i32 : i32 to vector<1x8xi32>
    %13 = arith.cmpi slt, %11, %12 : vector<1x8xi32>
    %cst_5 = arith.constant 0.000000e+00 : f32
    %14 = vector.broadcast %cst_5 : f32 to vector<1x8xf32>
    %15 = arith.select %13, %7, %14 : vector<1x8xi1>, vector<1x8xf32>
    %16 = math.sqrt %15 : vector<1x8xf32>
    %cst_6 = arith.constant 2.000000e+00 : f32
    %17 = vector.broadcast %cst_6 : f32 to vector<1x8xf32>
    %18 = arith.subf %17, %16 : vector<1x8xf32>
    %cst_7 = arith.constant 0.000000e+00 : f32
    %19 = vector.broadcast %cst_7 : f32 to vector<1x8xf32>
    %20 = arith.maximumf %18, %19 : vector<1x8xf32>
    %c0_8 = arith.constant 0 : index
    %c0_9 = arith.constant 0 : index
    %c0_10 = arith.constant 0 : index
    %21 = vector.load %arg3[%c0_8, %c0_9, %c0_10] : memref<1x1x8xf32, #tpu.memory_space<vmem>>, vector<1x1x8xf32>
    %22 = vector.shape_cast %21 : vector<1x1x8xf32> to vector<1x8xf32>
    %23 = arith.mulf %20, %20 : vector<1x8xf32>
    %24 = arith.subf %23, %15 : vector<1x8xf32>
    %25 = arith.mulf %22, %24 : vector<1x8xf32>
    %26 = arith.addf %15, %25 : vector<1x8xf32>
    %27 = vector.shape_cast %26 : vector<1x8xf32> to vector<1x1x8xf32>
    %cst_11 = arith.constant dense<0.000000e+00> : vector<1xf32>
    %28 = vector.multi_reduction <add>, %27, %cst_11 [1, 2] : vector<1x1x8xf32> to vector<1xf32>
    %29 = vector.shape_cast %28 : vector<1xf32> to vector<1x1x1xf32>
    %30 = vector.extract %29[0, 0, 0] : f32 from vector<1x1x1xf32>
    %31 = tpu.iota {dimensions = array<i32: 0>} : vector<8x128xi32>
    %32 = tpu.iota {dimensions = array<i32: 1>} : vector<8x128xi32>
    %c0_i32 = arith.constant 0 : i32
    %33 = vector.broadcast %c0_i32 : i32 to vector<8x128xi32>
    %34 = arith.cmpi eq, %31, %33 : vector<8x128xi32>
    %c0_i32_12 = arith.constant 0 : i32
    %35 = vector.broadcast %c0_i32_12 : i32 to vector<8x128xi32>
    %36 = arith.cmpi eq, %32, %35 : vector<8x128xi32>
    %37 = arith.andi %34, %36 : vector<8x128xi1>
    %cst_13 = arith.constant 0.000000e+00 : f32
    %38 = vector.broadcast %30 : f32 to vector<8x128xf32>
    %39 = vector.broadcast %cst_13 : f32 to vector<8x128xf32>
    %40 = arith.select %37, %38, %39 : vector<8x128xi1>, vector<8x128xf32>
    %c0_14 = arith.constant 0 : index
    %c0_15 = arith.constant 0 : index
    %41 = vector.load %arg4[%c0_14, %c0_15] : memref<8x128xf32, #tpu.memory_space<vmem>>, vector<8x128xf32>
    tpu.vector_store %arg4[%c0_14, %c0_15], %40 {strides = array<i32>} : memref<8x128xf32, #tpu.memory_space<vmem>>, vector<8x128xf32>,
    return
  }
  func.func @transform_0(%arg0: i32) -> (i32, i32) {
    %c0_i32 = arith.constant 0 : i32
    %c0_i32_0 = arith.constant 0 : i32
    return %arg0, %c0_i32 : i32, i32
  }
  func.func @transform_1(%arg0: i32) -> (i32, i32) {
    %c0_i32 = arith.constant 0 : i32
    %c0_i32_0 = arith.constant 0 : i32
    return %arg0, %c0_i32 : i32, i32
  }
  func.func @transform_2(%arg0: i32) -> (i32, i32, i32) {
    %c0_i32 = arith.constant 0 : i32
    %c0_i32_0 = arith.constant 0 : i32
    %c0_i32_1 = arith.constant 0 : i32
    return %arg0, %c0_i32, %c0_i32_0 : i32, i32, i32
  }
  func.func @transform_3(%arg0: i32) -> (i32, i32) {
    %c0_i32 = arith.constant 0 : i32
    %c0_i32_0 = arith.constant 0 : i32
    return %arg0, %c0_i32 : i32, i32
  }
}

</mosaic_0001>

<llo_original>
// kernel: tpu_custom_call.1
$region0: #{tpu_custom_call.1}
  #allocation0 [shape = 'u32[]', space=smem, size = 0x4, offset = 0x4, fixed_abs, tag = 'smem constant byte address 0x4 - core index']
  #allocation1 [shape = 'u32[72,128]{1,0:T(1,128)}', space=vmem, size = 0x9000, scoped, tag = 'internal scratch']
  %s0 = inlined_call_operand.hbm [shape: f32[20,32], index: 0, kind: input, shape index: {}]
  %s1 = inlined_call_operand.hbm [shape: f32[20,32], index: 1, kind: input, shape index: {}]
  %s2 = inlined_call_operand.hbm [shape: f32[3,1,8], index: 2, kind: input, shape index: {}]
  %s3 = inlined_call_operand.hbm [shape: f32[24,128], index: 3, kind: output, shape index: {}]
  %s4 = sld [smem:[#allocation0]]
  $region57: #{tpu_custom_call.1} parent=0
    _
  %s6 = ssub.s32 1, %s4
  %s7 = scalar_select 0, %s6, %s4
  $region1: #{tpu_custom_call.1} parent=0
    #allocation2 [shape = 'u8[8192]{0}', space=vmem, size = 0x2000, scoped, tag = 'input window, operand 0']
    #allocation3 [shape = 's32[2]{0}', space=sflag, size = 0x8, scoped, tag = 'scoped memory for tpu_custom_call.1']
    #allocation4 [shape = 's32[2]{0}', space=sflag, size = 0x8, scoped, tag = 'scoped memory for tpu_custom_call.1']
    #allocation5 [shape = 'u8[8192]{0}', space=vmem, size = 0x2000, scoped, tag = 'input window, operand 1']
    #allocation6 [shape = 's32[2]{0}', space=sflag, size = 0x8, scoped, tag = 'scoped memory for tpu_custom_call.1']
    #allocation7 [shape = 'u8[1024]{0}', space=vmem, size = 0x400, scoped, tag = 'input window, operand 2']
    #allocation8 [shape = 'u8[8192]{0}', space=vmem, size = 0x2000, scoped, tag = 'output window, operand 0']
    %8 = vsyncpa [#allocation3], 0
    %s9 = scalar_lea.sflag [#allocation3], 1
    %10 = vsyncpa %s9, 0
    %11 = vsyncpa [#allocation6], 0
    %s12 = scalar_lea.sflag [#allocation6], 1
    %13 = vsyncpa %s12, 0
    %14 = vsyncpa [#allocation4], 0
    %s15 = scalar_lea.sflag [#allocation4], 1
    %16 = vsyncpa %s15, 0
    loop: start=0, step=1, limit=5
    $region2: #{tpu_custom_call.1} parent=1 // loop_pre_header
      _
    $region3: #{tpu_custom_call.1} parent=1 // loop_header
      %s18 = sphi 0, %s22
      %p19 = scmp.ge.s32.totalorder %s18, 5
      %s28 = sphi 0, %s30
      %s31 = sphi 0, %s28
      %s32 = sphi 0, %s31
      %s48 = sphi 0, %s32
      %s54 = sphi 0, %s56
      %s57 = sphi 0, %s54
      %s58 = sphi 0, %s57
      %s74 = sphi 0, %s58
      %s80 = sphi 0, %s82
      %s83 = sphi 0, %s80
      %s84 = sphi 0, %s83
      %s100 = sphi 0, %s84
      %s106 = sphi 0, %s108
      %s109 = sphi 0, %s106
      %s110 = sphi 0, %s109
      %s126 = sphi 0, %s110
    $region4: #{tpu_custom_call.1} parent=1 // loop_header_branch
      %21 = sbr.rel (%p19) target = $region8
    $region5: #{tpu_custom_call.1} parent=1 // loop_body
      %s23 = ssub.s32 %s18, 1
      %s24 = ssub.s32 %s18, 2
      %s25 = sadd.s32 %s18, 1
      %s26 = ssub.s32 %s18, %s25
      %p27 = scmp.eq.s32.totalorder %s26, 0
      %s29 = sadd.s32 %s28, 1
      %s30 = scalar_select %p27, %s28, %s29
      %p33 = pneg %p27
      %p34 = scmp.eq.s32.totalorder %s18, 2
      %p35 = por %p33, %p34
      %p36 = scmp.ne.s32.totalorder %s28, %s31
      %p37 = scmp.eq.s32.totalorder %s18, 0
      %p38 = por %p36, %p37
      %p39 = scmp.ne.s32.totalorder %s28, %s31
      %p40 = scmp.eq.s32.totalorder %s23, 2
      %p41 = por %p39, %p40
      %p42 = scmp.ne.s32.totalorder %s31, %s32
      %p43 = scmp.eq.s32.totalorder %s23, 0
      %p44 = por %p42, %p43
      %p45 = scmp.ne.s32.totalorder %s31, %s32
      %p46 = scmp.eq.s32.totalorder %s24, 2
      %p47 = por %p45, %p46
      %p49 = scmp.ne.s32.totalorder %s32, %s48
      %p50 = scmp.eq.s32.totalorder %s24, 0
      %p51 = por %p49, %p50
      %s52 = ssub.s32 %s18, %s25
      %p53 = scmp.eq.s32.totalorder %s52, 0
      %s55 = sadd.s32 %s54, 1
      %s56 = scalar_select %p53, %s54, %s55
      %p59 = pneg %p53
      %p60 = scmp.eq.s32.totalorder %s18, 2
      %p61 = por %p59, %p60
      %p62 = scmp.ne.s32.totalorder %s54, %s57
      %p63 = scmp.eq.s32.totalorder %s18, 0
      %p64 = por %p62, %p63
      %p65 = scmp.ne.s32.totalorder %s54, %s57
      %p66 = scmp.eq.s32.totalorder %s23, 2
      %p67 = por %p65, %p66
      %p68 = scmp.ne.s32.totalorder %s57, %s58
      %p69 = scmp.eq.s32.totalorder %s23, 0
      %p70 = por %p68, %p69
      %p71 = scmp.ne.s32.totalorder %s57, %s58
      %p72 = scmp.eq.s32.totalorder %s24, 2
      %p73 = por %p71, %p72
      %p75 = scmp.ne.s32.totalorder %s58, %s74
      %p76 = scmp.eq.s32.totalorder %s24, 0
      %p77 = por %p75, %p76
      %s78 = ssub.s32 %s18, %s25
      %p79 = scmp.eq.s32.totalorder %s78, 0
      %s81 = sadd.s32 %s80, 1
      %s82 = scalar_select %p79, %s80, %s81
      %p85 = pneg %p79
      %p86 = scmp.eq.s32.totalorder %s18, 2
      %p87 = por %p85, %p86
      %p88 = scmp.ne.s32.totalorder %s80, %s83
      %p89 = scmp.eq.s32.totalorder %s18, 0
      %p90 = por %p88, %p89
      %p91 = scmp.ne.s32.totalorder %s80, %s83
      %p92 = scmp.eq.s32.totalorder %s23, 2
      %p93 = por %p91, %p92
      %p94 = scmp.ne.s32.totalorder %s83, %s84
      %p95 = scmp.eq.s32.totalorder %s23, 0
      %p96 = por %p94, %p95
      %p97 = scmp.ne.s32.totalorder %s83, %s84
      %p98 = scmp.eq.s32.totalorder %s24, 2
      %p99 = por %p97, %p98
      %p101 = scmp.ne.s32.totalorder %s84, %s100
      %p102 = scmp.eq.s32.totalorder %s24, 0
      %p103 = por %p101, %p102
      %s104 = ssub.s32 %s18, %s25
      %p105 = scmp.eq.s32.totalorder %s104, 0
      %s107 = sadd.s32 %s106, 1
      %s108 = scalar_select %p105, %s106, %s107
      %p111 = pneg %p105
      %p112 = scmp.eq.s32.totalorder %s18, 2
      %p113 = por %p111, %p112
      %p114 = scmp.ne.s32.totalorder %s106, %s109
      %p115 = scmp.eq.s32.totalorder %s18, 0
      %p116 = por %p114, %p115
      %p117 = scmp.ne.s32.totalorder %s106, %s109
      %p118 = scmp.eq.s32.totalorder %s23, 2
      %p119 = por %p117, %p118
      %p120 = scmp.ne.s32.totalorder %s109, %s110
      %p121 = scmp.eq.s32.totalorder %s23, 0
      %p122 = por %p120, %p121
      %p123 = scmp.ne.s32.totalorder %s109, %s110
      %p124 = scmp.eq.s32.totalorder %s24, 2
      %p125 = por %p123, %p124
      %p127 = scmp.ne.s32.totalorder %s110, %s126
      %p128 = scmp.eq.s32.totalorder %s24, 0
      %p129 = por %p127, %p128
      %p130 = scmp.le.s32.totalorder 1, %s18
      %p131 = scmp.lt.s32.totalorder %s18, 4
      %p132 = pnand %p130, %p131
      %p133 = pneg %p132
      // Predicated region
      $region9: #{tpu_custom_call.1} parent=5 // pred_check
        _
      $region10: #{tpu_custom_call.1} parent=5 // pred_check_branch
        %135 = sbr.rel (%p132) target = $region12
      $region11: #{tpu_custom_call.1} parent=5 // pred_region
        %s136 = ssub.s32 %s18, 1
      $region12: #{tpu_custom_call.1} parent=5 // pred_fallthru
        _
      %p137 = scmp.lt.s32.totalorder %s18, 3
      // Predicated region
      $region13: #{tpu_custom_call.1} parent=5 // pred_check
        %p138 = pneg %p137
      $region14: #{tpu_custom_call.1} parent=5 // pred_check_branch
        %140 = sbr.rel (%p138) target = $region16
      $region15: #{tpu_custom_call.1} parent=5 // pred_region
        // Predicated region
        $region17: #{tpu_custom_call.1} parent=15 // pred_check
          %p141 = pneg %p38
        $region18: #{tpu_custom_call.1} parent=15 // pred_check_branch
          %143 = sbr.rel (%p141) target = $region20
        $region19: #{tpu_custom_call.1} parent=15 // pred_region
          %s144 = sand.u32 %s28, 1
          %s145 = scalar_lea.sflag [#allocation3], %s144
          %s146 = sand.u32 %s28, 1
          %s147 = smul.addr %s146, 8
          %s148 = scalar_lea.vmem [#allocation2], %s147
          %150 = vsyncadd %s145, 0
          %s151 = smul.addr %s18, 8
          %s152 = scalar_lea.hbm %s0, %s151
          %s154 = sshll.u32 %s152, 4
          %s155 = int_to_ptr.hbm [resolvable:$true] %s154
          %s156 = sshll.u32 %s148, 4
          %s157 = int_to_ptr.vmem [resolvable:$true] %s156
          %159 = dma.hbm_to_vmem [thread:$0]  %s155, 128, %s157, %s145
        $region20: #{tpu_custom_call.1} parent=15 // pred_fallthru
          _
        // Predicated region
        $region21: #{tpu_custom_call.1} parent=15 // pred_check
          %p160 = pneg %p64
        $region22: #{tpu_custom_call.1} parent=15 // pred_check_branch
          %162 = sbr.rel (%p160) target = $region24
        $region23: #{tpu_custom_call.1} parent=15 // pred_region
          %s163 = sand.u32 %s18, 1
          %s164 = scalar_lea.sflag [#allocation6], %s163
          %s165 = sand.u32 %s54, 1
          %s166 = smul.addr %s165, 8
          %s167 = scalar_lea.vmem [#allocation5], %s166
          %169 = vsyncadd %s164, 0
          %s170 = smul.addr %s18, 8
          %s171 = scalar_lea.hbm %s1, %s170
          %s173 = sshll.u32 %s171, 4
          %s174 = int_to_ptr.hbm [resolvable:$true] %s173
          %s175 = sshll.u32 %s167, 4
          %s176 = int_to_ptr.vmem [resolvable:$true] %s175
          %178 = dma.hbm_to_vmem [thread:$0]  %s174, 128, %s176, %s164
        $region24: #{tpu_custom_call.1} parent=15 // pred_fallthru
          _
        // Predicated region
        $region25: #{tpu_custom_call.1} parent=15 // pred_check
          %p179 = pneg %p90
        $region26: #{tpu_custom_call.1} parent=15 // pred_check_branch
          %181 = sbr.rel (%p179) target = $region28
        $region27: #{tpu_custom_call.1} parent=15 // pred_region
          %s182 = sand.u32 %s18, 1
          %s183 = scalar_lea.sflag [#allocation6], %s182
          %s184 = sand.u32 %s80, 1
          %s185 = scalar_lea.vmem [#allocation7], %s184
          %187 = vsyncadd %s183, 0
          %s188 = scalar_lea.hbm %s2, %s18
          %s190 = sshll.u32 %s188, 4
          %s191 = int_to_ptr.hbm [resolvable:$true] %s190
          %s192 = sshll.u32 %s185, 4
          %s193 = int_to_ptr.vmem [resolvable:$true] %s192
          %195 = dma.hbm_to_vmem [thread:$0]  %s191, 16, %s193, %s183
        $region28: #{tpu_custom_call.1} parent=15 // pred_fallthru
          _
      $region16: #{tpu_custom_call.1} parent=5 // pred_fallthru
        _
      %p196 = scmp.le.s32.totalorder 1, %s18
      %p197 = scmp.lt.s32.totalorder %s18, 4
      %p198 = pnand %p196, %p197
      %p199 = pneg %p198
      // Predicated region
      $region29: #{tpu_custom_call.1} parent=5 // pred_check
        _
      $region30: #{tpu_custom_call.1} parent=5 // pred_check_branch
        %201 = sbr.rel (%p198) target = $region32
      $region31: #{tpu_custom_call.1} parent=5 // pred_region
        %s202 = ssub.s32 %s18, 1
        %s203 = sand.u32 %s31, 1
        %s204 = scalar_lea.sflag [#allocation3], %s203
        %s205 = sand.u32 %s31, 1
        %s206 = smul.addr %s205, 8
        %s207 = scalar_lea.vmem [#allocation2], %s206
        // Predicated region
        $region33: #{tpu_custom_call.1} parent=31 // pred_check
          %p208 = pneg %p44
        $region34: #{tpu_custom_call.1} parent=31 // pred_check_branch
          %210 = sbr.rel (%p208) target = $region36
        $region35: #{tpu_custom_call.1} parent=31 // pred_region
          %212 = dma.done %s204, 128
        $region36: #{tpu_custom_call.1} parent=31 // pred_fallthru
          _
        %s213 = sand.u32 %s23, 1
        %s214 = scalar_lea.sflag [#allocation6], %s213
        %s215 = sand.u32 %s57, 1
        %s216 = smul.addr %s215, 8
        %s217 = scalar_lea.vmem [#allocation5], %s216
        // Predicated region
        $region37: #{tpu_custom_call.1} parent=31 // pred_check
          %p218 = pneg %p70
        $region38: #{tpu_custom_call.1} parent=31 // pred_check_branch
          %220 = sbr.rel (%p218) target = $region40
        $region39: #{tpu_custom_call.1} parent=31 // pred_region
          %222 = dma.done %s214, 128
        $region40: #{tpu_custom_call.1} parent=31 // pred_fallthru
          _
        %s223 = sand.u32 %s23, 1
        %s224 = scalar_lea.sflag [#allocation6], %s223
        %s225 = sand.u32 %s83, 1
        %s226 = scalar_lea.vmem [#allocation7], %s225
        // Predicated region
        $region41: #{tpu_custom_call.1} parent=31 // pred_check
          %p227 = pneg %p96
        $region42: #{tpu_custom_call.1} parent=31 // pred_check_branch
          %229 = sbr.rel (%p227) target = $region44
        $region43: #{tpu_custom_call.1} parent=31 // pred_region
          %231 = dma.done %s224, 16
        $region44: #{tpu_custom_call.1} parent=31 // pred_fallthru
          _
        %s232 = sand.u32 %s31, 1
        %s233 = scalar_lea.sflag [#allocation3], %s232
        %s234 = sand.u32 %s31, 1
        %s235 = smul.addr %s234, 8
        %s236 = scalar_lea.vmem [#allocation2], %s235
        %p237 = pneg %p44
        %p238 = pneg %p41
        %s239 = sand.u32 %s23, 1
        %s240 = scalar_lea.sflag [#allocation6], %s239
        %s241 = sand.u32 %s57, 1
        %s242 = smul.addr %s241, 8
        %s243 = scalar_lea.vmem [#allocation5], %s242
        %p244 = pneg %p70
        %p245 = pneg %p67
        %s246 = sand.u32 %s23, 1
        %s247 = scalar_lea.sflag [#allocation6], %s246
        %s248 = sand.u32 %s83, 1
        %s249 = scalar_lea.vmem [#allocation7], %s248
        %p250 = pneg %p96
        %p251 = pneg %p93
        %p252 = pneg %p122
        %p253 = pneg %p119
        %s254 = sand.u32 %s109, 1
        %s255 = scalar_lea.sflag [#allocation4], %s254
        %s256 = sand.u32 %s109, 1
        %s257 = smul.addr %s256, 8
        %s258 = scalar_lea.vmem [#allocation8], %s257
        %v259 = vld [vmem:[%s207] sm:$0xff]
        %v260 = vld [vmem:[%s217] sm:$0xff]
        %v261 = vsub.f32 %v259, %v260
        %v262 = vadd.f32 %v261, 1e-06
        %v263 = vmul.f32 %v262, %v262
        %vm264 = vcmask 261120
        %v266 = vsel %vm264, 1.0, 0
        %v269 = vsel %vm264, %v263, 0
        %271 = vmatpush.xpose.msra.mxu0 0.0
        %272 = vmatpush.xpose.msra.mxu0 0.0
        %273 = vmatpush.xpose.msra.mxu0 0.0
        %274 = vmatpush.xpose.msra.mxu0 0.0
        %275 = vmatpush.xpose.msra.mxu0 0.0
        %276 = vmatpush.xpose.msra.mxu0 0.0
        %277 = vmatpush.xpose.msra.mxu0 0.0
        %278 = vmatpush.xpose.msra.mxu0 0.0
        %279 = vmatpush.xpose.msra.mxu0 0.0
        %280 = vmatpush.xpose.msra.mxu0 0.0
        %281 = vmatpush.xpose.msra.mxu0 0.0
        %282 = vmatpush.xpose.msra.mxu0 0.0
        %283 = vmatpush.xpose.msra.mxu0 0.0
        %284 = vmatpush.xpose.msra.mxu0 0.0
        %285 = vmatpush.xpose.msra.mxu0 0.0
        %v286 = vand.u32 %v269, 4294901760
        %287 = vmatpush.xpose.msra.mxu0 %v286
        %v288 = vand.u32 %v266, 4294901760
        %v289 = vsub.f32 %v266, %v288
        %v290 = vand.u32 %v289, 4294901760
        %v291 = vsub.f32 %v289, %v290
        %v292 = vand.u32 %v291, 4294901760
        %293 = vmatmul.f32.gmra.mxu0 %v292
        %v294 = vpop.f32.mrf.mxu0
        %v295 = vadd.f32 0.0, %v294
        %296 = vdwg.mxu0
        %297 = vmatpush.xpose.msra.mxu0 0.0
        %298 = vmatpush.xpose.msra.mxu0 0.0
        %299 = vmatpush.xpose.msra.mxu0 0.0
        %300 = vmatpush.xpose.msra.mxu0 0.0
        %301 = vmatpush.xpose.msra.mxu0 0.0
        %302 = vmatpush.xpose.msra.mxu0 0.0
        %303 = vmatpush.xpose.msra.mxu0 0.0
        %304 = vmatpush.xpose.msra.mxu0 0.0
        %305 = vmatpush.xpose.msra.mxu0 0.0
        %306 = vmatpush.xpose.msra.mxu0 0.0
        %307 = vmatpush.xpose.msra.mxu0 0.0
        %308 = vmatpush.xpose.msra.mxu0 0.0
        %309 = vmatpush.xpose.msra.mxu0 0.0
        %310 = vmatpush.xpose.msra.mxu0 0.0
        %311 = vmatpush.xpose.msra.mxu0 0.0
        %v312 = vand.u32 %v269, 4294901760
        %v313 = vsub.f32 %v269, %v312
        %v314 = vand.u32 %v313, 4294901760
        %v315 = vsub.f32 %v313, %v314
        %v316 = vand.u32 %v315, 4294901760
        %317 = vmatpush.xpose.msra.mxu0 %v316
        %v318 = vand.u32 %v266, 4294901760
        %319 = vmatmul.f32.gmra.mxu0 %v318
        %v320 = vpop.f32.mrf.mxu0
        %v321 = vadd.f32 %v295, %v320
        %322 = vdwg.mxu0
        %323 = vmatpush.xpose.msra.mxu0 0.0
        %324 = vmatpush.xpose.msra.mxu0 0.0
        %325 = vmatpush.xpose.msra.mxu0 0.0
        %326 = vmatpush.xpose.msra.mxu0 0.0
        %327 = vmatpush.xpose.msra.mxu0 0.0
        %328 = vmatpush.xpose.msra.mxu0 0.0
        %329 = vmatpush.xpose.msra.mxu0 0.0
        %330 = vmatpush.xpose.msra.mxu0 0.0
        %331 = vmatpush.xpose.msra.mxu0 0.0
        %332 = vmatpush.xpose.msra.mxu0 0.0
        %333 = vmatpush.xpose.msra.mxu0 0.0
        %334 = vmatpush.xpose.msra.mxu0 0.0
        %335 = vmatpush.xpose.msra.mxu0 0.0
        %336 = vmatpush.xpose.msra.mxu0 0.0
        %337 = vmatpush.xpose.msra.mxu0 0.0
        %v338 = vand.u32 %v269, 4294901760
        %v339 = vsub.f32 %v269, %v338
        %340 = vmatpush.xpose.msra.mxu0 %v339
        %v341 = vand.u32 %v266, 4294901760
        %v342 = vsub.f32 %v266, %v341
        %343 = vmatmul.f32.gmra.mxu0 %v342
        %v344 = vpop.f32.mrf.mxu0
        %v345 = vadd.f32 %v321, %v344
        %346 = vdwg.mxu0
        %347 = vmatpush.xpose.msra.mxu0 0.0
        %348 = vmatpush.xpose.msra.mxu0 0.0
        %349 = vmatpush.xpose.msra.mxu0 0.0
        %350 = vmatpush.xpose.msra.mxu0 0.0
        %351 = vmatpush.xpose.msra.mxu0 0.0
        %352 = vmatpush.xpose.msra.mxu0 0.0
        %353 = vmatpush.xpose.msra.mxu0 0.0
        %354 = vmatpush.xpose.msra.mxu0 0.0
        %355 = vmatpush.xpose.msra.mxu0 0.0
        %356 = vmatpush.xpose.msra.mxu0 0.0
        %357 = vmatpush.xpose.msra.mxu0 0.0
        %358 = vmatpush.xpose.msra.mxu0 0.0
        %359 = vmatpush.xpose.msra.mxu0 0.0
        %360 = vmatpush.xpose.msra.mxu0 0.0
        %361 = vmatpush.xpose.msra.mxu0 0.0
        %v362 = vand.u32 %v269, 4294901760
        %363 = vmatpush.xpose.msra.mxu0 %v362
        %v364 = vand.u32 %v266, 4294901760
        %v365 = vsub.f32 %v266, %v364
        %v366 = vand.u32 %v365, 4294901760
        %367 = vmatmul.f32.gmra.mxu0 %v366
        %v368 = vpop.f32.mrf.mxu0
        %v369 = vadd.f32 %v345, %v368
        %370 = vdwg.mxu0
        %371 = vmatpush.xpose.msra.mxu0 0.0
        %372 = vmatpush.xpose.msra.mxu0 0.0
        %373 = vmatpush.xpose.msra.mxu0 0.0
        %374 = vmatpush.xpose.msra.mxu0 0.0
        %375 = vmatpush.xpose.msra.mxu0 0.0
        %376 = vmatpush.xpose.msra.mxu0 0.0
        %377 = vmatpush.xpose.msra.mxu0 0.0
        %378 = vmatpush.xpose.msra.mxu0 0.0
        %379 = vmatpush.xpose.msra.mxu0 0.0
        %380 = vmatpush.xpose.msra.mxu0 0.0
        %381 = vmatpush.xpose.msra.mxu0 0.0
        %382 = vmatpush.xpose.msra.mxu0 0.0
        %383 = vmatpush.xpose.msra.mxu0 0.0
        %384 = vmatpush.xpose.msra.mxu0 0.0
        %385 = vmatpush.xpose.msra.mxu0 0.0
        %v386 = vand.u32 %v269, 4294901760
        %v387 = vsub.f32 %v269, %v386
        %v388 = vand.u32 %v387, 4294901760
        %389 = vmatpush.xpose.msra.mxu0 %v388
        %v390 = vand.u32 %v266, 4294901760
        %391 = vmatmul.f32.gmra.mxu0 %v390
        %v392 = vpop.f32.mrf.mxu0
        %v393 = vadd.f32 %v369, %v392
        %394 = vdwg.mxu0
        %395 = vmatpush.xpose.msra.mxu0 0.0
        %396 = vmatpush.xpose.msra.mxu0 0.0
        %397 = vmatpush.xpose.msra.mxu0 0.0
        %398 = vmatpush.xpose.msra.mxu0 0.0
        %399 = vmatpush.xpose.msra.mxu0 0.0
        %400 = vmatpush.xpose.msra.mxu0 0.0
        %401 = vmatpush.xpose.msra.mxu0 0.0
        %402 = vmatpush.xpose.msra.mxu0 0.0
        %403 = vmatpush.xpose.msra.mxu0 0.0
        %404 = vmatpush.xpose.msra.mxu0 0.0
        %405 = vmatpush.xpose.msra.mxu0 0.0
        %406 = vmatpush.xpose.msra.mxu0 0.0
        %407 = vmatpush.xpose.msra.mxu0 0.0
        %408 = vmatpush.xpose.msra.mxu0 0.0
        %409 = vmatpush.xpose.msra.mxu0 0.0
        %v410 = vand.u32 %v269, 4294901760
        %411 = vmatpush.xpose.msra.mxu0 %v410
        %v412 = vand.u32 %v266, 4294901760
        %413 = vmatmul.f32.gmra.mxu0 %v412
        %v414 = vpop.f32.mrf.mxu0
        %v415 = vadd.f32 %v393, %v414
        %416 = vdwg.mxu0
        %s417 = smul.u32 %s23, 8
        %v418 = vlaneseq
        %v419 = vand.u32 %v418, 127
        %v420 = vstv %s417
        %v421 = vadd.s32 %v420, %v419
        %vm422 = vcmp.lt.s32.totalorder %v421, 20
        %v423 = vsel %vm422, %v415, 0.0
        %v424 = vrsqrt.pop %v423
        %v425 = vmul.f32 %v424, %v423
        %v426 = vmul.f32 %v425, %v424
        %v427 = vmul.f32 0.5, %v426
        %v428 = vsub.f32 1.5, %v427
        %v429 = vmul.f32 %v424, %v428
        %v430 = vmul.f32 %v423, %v429
        %vm431 = vcmp.eq.f32.partialorder %v423, inf
        %v432 = vsel %vm431, %v423, %v430
        %vm433 = vcmp.eq.f32.partialorder %v423, 0.0
        %v434 = vand.u32 %v423, 2147483648
        %v435 = vsel %vm433, %v434, %v432
        %v436 = vsub.f32 2.0, %v435
        %v437 = vmax.f32 %v436, 0.0
        %v438 = vld [vmem:[%s226] sm:$0x1]
        %v439 = vmul.f32 %v437, %v437
        %v440 = vsub.f32 %v439, %v423
        %v441 = vmul.f32 %v438, %v440
        %v442 = vadd.f32 %v423, %v441
        %vm443 = vcmask 57344
        %v444 = vsel %vm443, %v442, 0.0
        %445 = vadd.xlane.f32.xlu0 %v444
        %v446 = vpop.xlane.xlu0 %445
        %v447 = vrot.slane %v446, 4
        %v448 = vadd.f32 %v446, %v447
        %v449 = vrot.slane %v448, 2
        %v450 = vadd.f32 %v448, %v449
        %v451 = vrot.slane %v450, 1
        %v452 = vadd.f32 %v450, %v451
        %s453 = vtos %v452
        %v454 = vlaneseq
        %v455 = vshrl.u32 %v454, 7
        %vm456 = vcmp.eq.s32.totalorder %v455, 0
        %vm457 = vcmp.eq.s32.totalorder %v419, 0
        %vm458 = vmand %vm456, %vm457
        %v459 = vstv %s453
        %v460 = vsel %vm458, %v459, 0.0
        %461 = vst [vmem:[%s258] sm:$0xff] %v460
        %s462 = sand.u32 %s109, 1
        %s463 = scalar_lea.sflag [#allocation4], %s462
        %s464 = sand.u32 %s109, 1
        %s465 = smul.addr %s464, 8
        %s466 = scalar_lea.vmem [#allocation8], %s465
        // Predicated region
        $region45: #{tpu_custom_call.1} parent=31 // pred_check
          %p467 = pneg %p119
        $region46: #{tpu_custom_call.1} parent=31 // pred_check_branch
          %469 = sbr.rel (%p467) target = $region48
        $region47: #{tpu_custom_call.1} parent=31 // pred_region
          %471 = vsyncadd %s463, 0
          %s472 = smul.addr %s23, 8
          %s473 = scalar_lea.hbm %s3, %s472
          %s475 = sshll.u32 %s466, 4
          %s476 = int_to_ptr.vmem [resolvable:$true] %s475
          %s477 = sshll.u32 %s473, 4
          %s478 = int_to_ptr.hbm [resolvable:$true] %s477
          %480 = dma.vmem_to_hbm [thread:$0]  %s476, 128, %s478, %s463
        $region48: #{tpu_custom_call.1} parent=31 // pred_fallthru
          _
      $region32: #{tpu_custom_call.1} parent=5 // pred_fallthru
        _
      %p481 = scmp.le.s32.totalorder 2, %s18
      // Predicated region
      $region49: #{tpu_custom_call.1} parent=5 // pred_check
        %p482 = pneg %p481
      $region50: #{tpu_custom_call.1} parent=5 // pred_check_branch
        %484 = sbr.rel (%p482) target = $region52
      $region51: #{tpu_custom_call.1} parent=5 // pred_region
        %s485 = ssub.s32 %s18, 2
        // Predicated region
        $region53: #{tpu_custom_call.1} parent=51 // pred_check
          %p486 = pneg %p125
        $region54: #{tpu_custom_call.1} parent=51 // pred_check_branch
          %488 = sbr.rel (%p486) target = $region56
        $region55: #{tpu_custom_call.1} parent=51 // pred_region
          %s489 = sand.u32 %s110, 1
          %s490 = scalar_lea.sflag [#allocation4], %s489
          %s491 = sand.u32 %s110, 1
          %s492 = smul.addr %s491, 8
          %s493 = scalar_lea.vmem [#allocation8], %s492
          %495 = dma.done %s490, 128
        $region56: #{tpu_custom_call.1} parent=51 // pred_fallthru
          _
      $region52: #{tpu_custom_call.1} parent=5 // pred_fallthru
        _
    $region6: #{tpu_custom_call.1} parent=1 // loop_footer
      %s22 = sadd.s32 1, %s18
    $region7: #{tpu_custom_call.1} parent=1 // loop_footer_branch
      %17 = sbr.rel target = $region3
    $region8: #{tpu_custom_call.1} parent=1 // loop_exit
      _
    %496 = vsyncpa [#allocation3], 1
    %s497 = scalar_lea.sflag [#allocation3], 1
    %498 = vsyncpa %s497, 1
    %499 = vsyncpa [#allocation6], 1
    %s500 = scalar_lea.sflag [#allocation6], 1
    %501 = vsyncpa %s500, 1
    %502 = vsyncpa [#allocation4], 1
    %s503 = scalar_lea.sflag [#allocation4], 1
    %504 = vsyncpa %s503, 1

</llo_original>
